<compile_context>
chip_gen: v6e
topology: v6e:2x2x1
jax: 0.10.0
libtpu: 0.0.40
codegen_flags: <defaults>
</compile_context>

<pallas_src>
import jax
import jax.numpy as jnp
from jax.experimental import pallas as pl
from jax.experimental.pallas import tpu as pltpu

_OUT_PAD = 128  # lane-dense padded width of the final Linear(H, 2) output


def _round_up(x, m):
    return ((x + m - 1) // m) * m


def mlp_diffusion_kernel(x_ref, t_ref, e0_ref, e1_ref, e2_ref,
                         w0_ref, w1_ref, w2_ref, w3_ref, b3_ref,
                         o_ref):
    tm = x_ref.shape[0]
    n_steps = e0_ref.shape[0]

    x = x_ref[...]                    # (tm, 2)  f32
    t_col = t_ref[...]                # (tm, 1)  i32

    # Exact one-hot of the step indices; (tm, n_steps) f32.
    steps = jax.lax.broadcasted_iota(jnp.int32, (tm, n_steps), 1)
    onehot = (steps == t_col).astype(jnp.float32)

    # Step embeddings (layer biases pre-folded into the tables) via MXU matmuls.
    e0 = jnp.dot(onehot, e0_ref[...], preferred_element_type=jnp.float32)
    e1 = jnp.dot(onehot, e1_ref[...], preferred_element_type=jnp.float32)
    e2 = jnp.dot(onehot, e2_ref[...], preferred_element_type=jnp.float32)

    # Layer 0: Linear(2, H) as two VPU broadcast FMAs (K=2 would waste the MXU).
    w0 = w0_ref[...]                  # (2, H)
    h = x[:, 0:1] * w0[0:1, :] + x[:, 1:2] * w0[1:2, :]
    h = jnp.maximum(h + e0, 0.0)

    # Layer 1: Linear(H, H) + emb + ReLU
    h = jnp.dot(h, w1_ref[...], preferred_element_type=jnp.float32)
    h = jnp.maximum(h + e1, 0.0)

    # Layer 2: Linear(H, H) + emb + ReLU
    h = jnp.dot(h, w2_ref[...], preferred_element_type=jnp.float32)
    h = jnp.maximum(h + e2, 0.0)

    # Final: Linear(H, 2) with output zero-padded to 128 lanes (lane-dense store).
    out = jnp.dot(h, w3_ref[...], preferred_element_type=jnp.float32) + b3_ref[...]
    o_ref[...] = out.astype(o_ref.dtype)


def mlp_diffusion_forward(x0, t, params, *, tm=512):
    """x0: (B, 2) f32, t: (B,) int32, params: dict of weights/biases/embeddings."""
    B = x0.shape[0]
    H = params["w0"].shape[1]
    n_steps = params["emb0"].shape[0]

    # Batch tile: multiple of 8 sublanes, capped by (rounded-up) batch size.
    tm = max(8, min(tm, _round_up(B, 8)))
    B_pad = _round_up(B, tm)

    # Pad batch (zero rows, step index 0 -> valid gather, result sliced away).
    x_p = jnp.zeros((B_pad, 2), jnp.float32).at[:B].set(x0)
    t_p = jnp.zeros((B_pad, 1), jnp.int32).at[:B, 0].set(t.astype(jnp.int32))

    # Fold layer biases into the embedding tables (f32, exact).
    e0 = params["emb0"] + params["b0"]
    e1 = params["emb1"] + params["b1"]
    e2 = params["emb2"] + params["b2"]

    # Zero-pad the final projection to a lane-dense 128-wide output.
    w3p = jnp.zeros((H, _OUT_PAD), jnp.float32).at[:, :2].set(params["w3"])
    b3p = jnp.zeros((1, _OUT_PAD), jnp.float32).at[:, :2].set(params["b3"])

    def row_spec(shape):   # per-batch-tile blocks
        return pl.BlockSpec((tm, shape[1]), lambda i: (i, 0))

    def resident(shape):   # whole array, constant block -> stays in VMEM
        return pl.BlockSpec(shape, lambda i: (0, 0))

    out_pad = pl.pallas_call(
        mlp_diffusion_kernel,
        out_shape=jax.ShapeDtypeStruct((B_pad, _OUT_PAD), jnp.float32),
        grid=(B_pad // tm,),
        in_specs=[
            row_spec(x_p.shape),            # x
            row_spec(t_p.shape),            # t
            resident(e0.shape),             # emb0 (+b0)
            resident(e1.shape),             # emb1 (+b1)
            resident(e2.shape),             # emb2 (+b2)
            resident(params["w0"].shape),   # w0 (2, H)
            resident(params["w1"].shape),   # w1 (H, H)
            resident(params["w2"].shape),   # w2 (H, H)
            resident(w3p.shape),            # w3 padded (H, 128)
            resident(b3p.shape),            # b3 padded (1, 128)
        ],
        out_specs=pl.BlockSpec((tm, _OUT_PAD), lambda i: (i, 0)),
        compiler_params=pltpu.CompilerParams(
            dimension_semantics=("parallel",),
            vmem_limit_bytes=64 * 1024 * 1024,
        ),
    )(x_p, t_p, e0, e1, e2,
      params["w0"], params["w1"], params["w2"], w3p, b3p)

    return out_pad[:B, :2]


def init_params(key, n_steps, num_units):
    ks = jax.random.split(key, 11)

    def lin(kw, kb, fan_in, fan_out):
        # PyTorch-like uniform(-1/sqrt(fan_in), 1/sqrt(fan_in)); stored as (in, out)
        bound = 1.0 / (fan_in ** 0.5)
        w = jax.random.uniform(kw, (fan_in, fan_out), jnp.float32, -bound, bound)
        b = jax.random.uniform(kb, (1, fan_out), jnp.float32, -bound, bound)
        return w, b

    w0, b0 = lin(ks[0], ks[1], 2, num_units)
    w1, b1 = lin(ks[2], ks[3], num_units, num_units)
    w2, b2 = lin(ks[4], ks[5], num_units, num_units)
    w3, b3 = lin(ks[6], ks[7], num_units, 2)
    emb0 = jax.random.normal(ks[8], (n_steps, num_units), jnp.float32)
    emb1 = jax.random.normal(ks[9], (n_steps, num_units), jnp.float32)
    emb2 = jax.random.normal(ks[10], (n_steps, num_units), jnp.float32)
    return dict(w0=w0, b0=b0, w1=w1, b1=b1, w2=w2, b2=b2, w3=w3, b3=b3,
                emb0=emb0, emb1=emb1, emb2=emb2)


def reference_forward(x0, t, params):
    # Pure-JAX reference with identical semantics to the PyTorch module.
    e = [params["emb0"][t], params["emb1"][t], params["emb2"][t]]
    ws = [(params["w0"], params["b0"]), (params["w1"], params["b1"]),
          (params["w2"], params["b2"])]
    x = x0
    for (w, b), te in zip(ws, e):
        x = x @ w + b
        x = x + te
        x = jnp.maximum(x, 0.0)
    return x @ params["w3"] + params["b3"]


if __name__ == "__main__":
    n_steps = 16
    num_units = 32
    batch = 8

    key = jax.random.PRNGKey(0)
    kx, kt, kp = jax.random.split(key, 3)
    x0 = jax.random.normal(kx, (batch, 2), jnp.float32)
    t = jax.random.randint(kt, (batch,), 0, n_steps, jnp.int32)
    params = init_params(kp, n_steps, num_units)

    out = mlp_diffusion_forward(x0, t, params)
    out = jax.block_until_ready(out)

    ref = reference_forward(x0, t, params)
    assert out.shape == (batch, 2)
    assert jnp.allclose(out, ref, atol=1e-5, rtol=1e-5), "mismatch vs reference"

    print("KERNEL_OK")
</pallas_src>

<mosaic_0001>
module attributes {stable_mosaic.version = 11 : i64} {
  func.func @mlp_diffusion_kernel(%arg0: i32, %arg1: memref<8x2xf32, #tpu.memory_space<vmem>>, %arg2: memref<8x1xi32, #tpu.memory_space<vmem>>, %arg3: memref<16x32xf32, #tpu.memory_space<vmem>>, %arg4: memref<16x32xf32, #tpu.memory_space<vmem>>, %arg5: memref<16x32xf32, #tpu.memory_space<vmem>>, %arg6: memref<2x32xf32, #tpu.memory_space<vmem>>, %arg7: memref<32x32xf32, #tpu.memory_space<vmem>>, %arg8: memref<32x32xf32, #tpu.memory_space<vmem>>, %arg9: memref<32x128xf32, #tpu.memory_space<vmem>>, %arg10: memref<1x128xf32, #tpu.memory_space<vmem>>, %arg11: memref<8x128xf32, #tpu.memory_space<vmem>>) attributes {dimension_semantics = [#tpu.dimension_semantics<parallel>], iteration_bounds = array<i64: 1>, scalar_prefetch = 0 : i64, scratch_operands = 0 : i64, tpu.core_type = #tpu.core_type<tc>, window_params = [{transform_indices = @transform_0, window_bounds = array<i64: 8, 2>}, {transform_indices = @transform_1, window_bounds = array<i64: 8, 1>}, {pipeline_mode = #tpu.pipeline_mode<synchronous>, transform_indices = @transform_2, window_bounds = array<i64: 16, 32>}, {pipeline_mode = #tpu.pipeline_mode<synchronous>, transform_indices = @transform_3, window_bounds = array<i64: 16, 32>}, {pipeline_mode = #tpu.pipeline_mode<synchronous>, transform_indices = @transform_4, window_bounds = array<i64: 16, 32>}, {pipeline_mode = #tpu.pipeline_mode<synchronous>, transform_indices = @transform_5, window_bounds = array<i64: 2, 32>}, {pipeline_mode = #tpu.pipeline_mode<synchronous>, transform_indices = @transform_6, window_bounds = array<i64: 32, 32>}, {pipeline_mode = #tpu.pipeline_mode<synchronous>, transform_indices = @transform_7, window_bounds = array<i64: 32, 32>}, {pipeline_mode = #tpu.pipeline_mode<synchronous>, transform_indices = @transform_8, window_bounds = array<i64: 32, 128>}, {pipeline_mode = #tpu.pipeline_mode<synchronous>, transform_indices = @transform_9, window_bounds = array<i64: 1, 128>}, {transform_indices = @transform_10, window_bounds = array<i64: 8, 128>}]} {
    %c0 = arith.constant 0 : index
    %c0_0 = arith.constant 0 : index
    %0 = vector.load %arg1[%c0, %c0_0] : memref<8x2xf32, #tpu.memory_space<vmem>>, vector<8x2xf32>
    %c0_1 = arith.constant 0 : index
    %c0_2 = arith.constant 0 : index
    %1 = vector.load %arg2[%c0_1, %c0_2] : memref<8x1xi32, #tpu.memory_space<vmem>>, vector<8x1xi32>
    %2 = tpu.iota {dimensions = array<i32: 1>} : vector<8x16xi32>
    %3 = vector.broadcast %1 : vector<8x1xi32> to vector<8x16xi32>
    %4 = arith.cmpi eq, %2, %3 : vector<8x16xi32>
    %5 = arith.extui %4 : vector<8x16xi1> to vector<8x16xi32>
    %6 = arith.sitofp %5 : vector<8x16xi32> to vector<8x16xf32>
    %c0_3 = arith.constant 0 : index
    %c0_4 = arith.constant 0 : index
    %7 = vector.load %arg3[%c0_3, %c0_4] : memref<16x32xf32, #tpu.memory_space<vmem>>, vector<16x32xf32>
    %cst = arith.constant dense<0.000000e+00> : vector<8x32xf32>
    %8 = tpu.matmul %6, %7, %cst {dimension_numbers = #tpu.dot_dimension_numbers<[1], [0], [0], [1], [0, 0, 1, 1], [], []>} : vector<8x16xf32>, vector<16x32xf32>, vector<8x32xf32> -> vector<8x32xf32>
    %c0_5 = arith.constant 0 : index
    %c0_6 = arith.constant 0 : index
    %9 = vector.load %arg4[%c0_5, %c0_6] : memref<16x32xf32, #tpu.memory_space<vmem>>, vector<16x32xf32>
    %cst_7 = arith.constant dense<0.000000e+00> : vector<8x32xf32>
    %10 = tpu.matmul %6, %9, %cst_7 {dimension_numbers = #tpu.dot_dimension_numbers<[1], [0], [0], [1], [0, 0, 1, 1], [], []>} : vector<8x16xf32>, vector<16x32xf32>, vector<8x32xf32> -> vector<8x32xf32>
    %c0_8 = arith.constant 0 : index
    %c0_9 = arith.constant 0 : index
    %11 = vector.load %arg5[%c0_8, %c0_9] : memref<16x32xf32, #tpu.memory_space<vmem>>, vector<16x32xf32>
    %cst_10 = arith.constant dense<0.000000e+00> : vector<8x32xf32>
    %12 = tpu.matmul %6, %11, %cst_10 {dimension_numbers = #tpu.dot_dimension_numbers<[1], [0], [0], [1], [0, 0, 1, 1], [], []>} : vector<8x16xf32>, vector<16x32xf32>, vector<8x32xf32> -> vector<8x32xf32>
    %c0_11 = arith.constant 0 : index
    %c0_12 = arith.constant 0 : index
    %13 = vector.load %arg6[%c0_11, %c0_12] : memref<2x32xf32, #tpu.memory_space<vmem>>, vector<2x32xf32>
    %14 = vector.extract_strided_slice %0 {offsets = [0, 0], sizes = [8, 1], strides = [1, 1]} : vector<8x2xf32> to vector<8x1xf32>
    %15 = vector.extract_strided_slice %13 {offsets = [0, 0], sizes = [1, 32], strides = [1, 1]} : vector<2x32xf32> to vector<1x32xf32>
    %16 = vector.broadcast %14 : vector<8x1xf32> to vector<8x32xf32>
    %17 = vector.broadcast %15 : vector<1x32xf32> to vector<8x32xf32>
    %18 = arith.mulf %16, %17 : vector<8x32xf32>
    %19 = vector.extract_strided_slice %0 {offsets = [0, 1], sizes = [8, 1], strides = [1, 1]} : vector<8x2xf32> to vector<8x1xf32>
    %20 = vector.extract_strided_slice %13 {offsets = [1, 0], sizes = [1, 32], strides = [1, 1]} : vector<2x32xf32> to vector<1x32xf32>
    %21 = vector.broadcast %19 : vector<8x1xf32> to vector<8x32xf32>
    %22 = vector.broadcast %20 : vector<1x32xf32> to vector<8x32xf32>
    %23 = arith.mulf %21, %22 : vector<8x32xf32>
    %24 = arith.addf %18, %23 : vector<8x32xf32>
    %25 = arith.addf %24, %8 : vector<8x32xf32>
    %cst_13 = arith.constant 0.000000e+00 : f32
    %26 = vector.broadcast %cst_13 : f32 to vector<8x32xf32>
    %27 = arith.maximumf %25, %26 : vector<8x32xf32>
    %c0_14 = arith.constant 0 : index
    %c0_15 = arith.constant 0 : index
    %28 = vector.load %arg7[%c0_14, %c0_15] : memref<32x32xf32, #tpu.memory_space<vmem>>, vector<32x32xf32>
    %cst_16 = arith.constant dense<0.000000e+00> : vector<8x32xf32>
    %29 = tpu.matmul %27, %28, %cst_16 {dimension_numbers = #tpu.dot_dimension_numbers<[1], [0], [0], [1], [0, 0, 1, 1], [], []>} : vector<8x32xf32>, vector<32x32xf32>, vector<8x32xf32> -> vector<8x32xf32>
    %30 = arith.addf %29, %10 : vector<8x32xf32>
    %cst_17 = arith.constant 0.000000e+00 : f32
    %31 = vector.broadcast %cst_17 : f32 to vector<8x32xf32>
    %32 = arith.maximumf %30, %31 : vector<8x32xf32>
    %c0_18 = arith.constant 0 : index
    %c0_19 = arith.constant 0 : index
    %33 = vector.load %arg8[%c0_18, %c0_19] : memref<32x32xf32, #tpu.memory_space<vmem>>, vector<32x32xf32>
    %cst_20 = arith.constant dense<0.000000e+00> : vector<8x32xf32>
    %34 = tpu.matmul %32, %33, %cst_20 {dimension_numbers = #tpu.dot_dimension_numbers<[1], [0], [0], [1], [0, 0, 1, 1], [], []>} : vector<8x32xf32>, vector<32x32xf32>, vector<8x32xf32> -> vector<8x32xf32>
    %35 = arith.addf %34, %12 : vector<8x32xf32>
    %cst_21 = arith.constant 0.000000e+00 : f32
    %36 = vector.broadcast %cst_21 : f32 to vector<8x32xf32>
    %37 = arith.maximumf %35, %36 : vector<8x32xf32>
    %c0_22 = arith.constant 0 : index
    %c0_23 = arith.constant 0 : index
    %38 = vector.load %arg9[%c0_22, %c0_23] : memref<32x128xf32, #tpu.memory_space<vmem>>, vector<32x128xf32>
    %cst_24 = arith.constant dense<0.000000e+00> : vector<8x128xf32>
    %39 = tpu.matmul %37, %38, %cst_24 {dimension_numbers = #tpu.dot_dimension_numbers<[1], [0], [0], [1], [0, 0, 1, 1], [], []>} : vector<8x32xf32>, vector<32x128xf32>, vector<8x128xf32> -> vector<8x128xf32>
    %c0_25 = arith.constant 0 : index
    %c0_26 = arith.constant 0 : index
    %40 = vector.load %arg10[%c0_25, %c0_26] : memref<1x128xf32, #tpu.memory_space<vmem>>, vector<1x128xf32>
    %41 = vector.broadcast %40 : vector<1x128xf32> to vector<8x128xf32>
    %42 = arith.addf %39, %41 : vector<8x128xf32>
    %c0_27 = arith.constant 0 : index
    %c0_28 = arith.constant 0 : index
    %43 = vector.load %arg11[%c0_27, %c0_28] : memref<8x128xf32, #tpu.memory_space<vmem>>, vector<8x128xf32>
    tpu.vector_store %arg11[%c0_27, %c0_28], %42 {strides = array<i32>} : memref<8x128xf32, #tpu.memory_space<vmem>>, vector<8x128xf32>,
    return
  }
  func.func @transform_0(%arg0: i32) -> (i32, i32) {
    %c0_i32 = arith.constant 0 : i32
    %c0_i32_0 = arith.constant 0 : i32
    return %arg0, %c0_i32 : i32, i32
  }
  func.func @transform_1(%arg0: i32) -> (i32, i32) {
    %c0_i32 = arith.constant 0 : i32
    %c0_i32_0 = arith.constant 0 : i32
    return %arg0, %c0_i32 : i32, i32
  }
  func.func @transform_2(%arg0: i32) -> (i32, i32) {
    %c0_i32 = arith.constant 0 : i32
    %c0_i32_0 = arith.constant 0 : i32
    %c0_i32_1 = arith.constant 0 : i32
    return %c0_i32, %c0_i32_0 : i32, i32
  }
  func.func @transform_3(%arg0: i32) -> (i32, i32) {
    %c0_i32 = arith.constant 0 : i32
    %c0_i32_0 = arith.constant 0 : i32
    %c0_i32_1 = arith.constant 0 : i32
    return %c0_i32, %c0_i32_0 : i32, i32
  }
  func.func @transform_4(%arg0: i32) -> (i32, i32) {
    %c0_i32 = arith.constant 0 : i32
    %c0_i32_0 = arith.constant 0 : i32
    %c0_i32_1 = arith.constant 0 : i32
    return %c0_i32, %c0_i32_0 : i32, i32
  }
  func.func @transform_5(%arg0: i32) -> (i32, i32) {
    %c0_i32 = arith.constant 0 : i32
    %c0_i32_0 = arith.constant 0 : i32
    %c0_i32_1 = arith.constant 0 : i32
    return %c0_i32, %c0_i32_0 : i32, i32
  }
  func.func @transform_6(%arg0: i32) -> (i32, i32) {
    %c0_i32 = arith.constant 0 : i32
    %c0_i32_0 = arith.constant 0 : i32
    %c0_i32_1 = arith.constant 0 : i32
    return %c0_i32, %c0_i32_0 : i32, i32
  }
  func.func @transform_7(%arg0: i32) -> (i32, i32) {
    %c0_i32 = arith.constant 0 : i32
    %c0_i32_0 = arith.constant 0 : i32
    %c0_i32_1 = arith.constant 0 : i32
    return %c0_i32, %c0_i32_0 : i32, i32
  }
  func.func @transform_8(%arg0: i32) -> (i32, i32) {
    %c0_i32 = arith.constant 0 : i32
    %c0_i32_0 = arith.constant 0 : i32
    %c0_i32_1 = arith.constant 0 : i32
    return %c0_i32, %c0_i32_0 : i32, i32
  }
  func.func @transform_9(%arg0: i32) -> (i32, i32) {
    %c0_i32 = arith.constant 0 : i32
    %c0_i32_0 = arith.constant 0 : i32
    %c0_i32_1 = arith.constant 0 : i32
    return %c0_i32, %c0_i32_0 : i32, i32
  }
  func.func @transform_10(%arg0: i32) -> (i32, i32) {
    %c0_i32 = arith.constant 0 : i32
    %c0_i32_0 = arith.constant 0 : i32
    return %arg0, %c0_i32 : i32, i32
  }
}

</mosaic_0001>

<llo_original>
// kernel: tpu_custom_call.1
$region0: #{tpu_custom_call.1}
  #allocation0 [shape = 'u32[]', space=smem, size = 0x4, offset = 0x4, fixed_abs, tag = 'smem constant byte address 0x4 - core index']
  #allocation1 [shape = 'u32[144,128]{1,0:T(1,128)}', space=vmem, size = 0x12000, scoped, tag = 'internal scratch']
  %s0 = inlined_call_operand.vmem [shape: f32[8,2], index: 0, kind: input, shape index: {}]
  %s1 = inlined_call_operand.vmem [shape: s32[8,1], index: 1, kind: input, shape index: {}]
  %s2 = inlined_call_operand.hbm [shape: f32[16,32], index: 2, kind: input, shape index: {}]
  %s3 = inlined_call_operand.hbm [shape: f32[16,32], index: 3, kind: input, shape index: {}]
  %s4 = inlined_call_operand.hbm [shape: f32[16,32], index: 4, kind: input, shape index: {}]
  %s5 = inlined_call_operand.hbm [shape: f32[2,32], index: 5, kind: input, shape index: {}]
  %s6 = inlined_call_operand.hbm [shape: f32[32,32], index: 6, kind: input, shape index: {}]
  %s7 = inlined_call_operand.hbm [shape: f32[32,32], index: 7, kind: input, shape index: {}]
  %s8 = inlined_call_operand.vmem [shape: f32[32,128], index: 8, kind: input, shape index: {}]
  %s9 = inlined_call_operand.vmem [shape: f32[1,128], index: 9, kind: input, shape index: {}]
  %s10 = inlined_call_operand.hbm [shape: f32[8,128], index: 10, kind: output, shape index: {}]
  %s11 = sld [smem:[#allocation0]]
  $region74: #{tpu_custom_call.1} parent=0
    _
  %s13 = ssub.s32 1, %s11
  %s14 = scalar_select 0, %s13, %s11
  $region1: #{tpu_custom_call.1} parent=0
    #allocation2 [shape = 'u8[8192]{0}', space=vmem, size = 0x2000, scoped, tag = 'input window, operand 2, single buffered']
    #allocation3 [shape = 's32[1]{0}', space=sflag, size = 0x4, scoped, tag = 'scoped memory for tpu_custom_call.1']
    #allocation4 [shape = 's32[1]{0}', space=sflag, size = 0x4, scoped, tag = 'scoped memory for tpu_custom_call.1']
    #allocation5 [shape = 'u8[8192]{0}', space=vmem, size = 0x2000, scoped, tag = 'input window, operand 3, single buffered']
    #allocation6 [shape = 's32[1]{0}', space=sflag, size = 0x4, scoped, tag = 'scoped memory for tpu_custom_call.1']
    #allocation7 [shape = 'u8[8192]{0}', space=vmem, size = 0x2000, scoped, tag = 'input window, operand 4, single buffered']
    #allocation8 [shape = 'u8[1024]{0}', space=vmem, size = 0x400, scoped, tag = 'input window, operand 5, single buffered']
    #allocation9 [shape = 's32[1]{0}', space=sflag, size = 0x4, scoped, tag = 'scoped memory for tpu_custom_call.1']
    #allocation10 [shape = 'u8[16384]{0}', space=vmem, size = 0x4000, scoped, tag = 'input window, operand 6, single buffered']
    #allocation11 [shape = 'u8[16384]{0}', space=vmem, size = 0x4000, scoped, tag = 'input window, operand 7, single buffered']
    #allocation12 [shape = 's32[1]{0}', space=sflag, size = 0x4, scoped, tag = 'scoped memory for tpu_custom_call.1']
    #allocation13 [shape = 'u8[4096]{0}', space=vmem, size = 0x1000, scoped, tag = 'output window, operand 0, single buffered']
    %15 = vsyncpa [#allocation3], 0
    %16 = vsyncpa [#allocation6], 0
    %17 = vsyncpa [#allocation9], 0
    %18 = vsyncpa [#allocation12], 0
    %19 = vsyncpa [#allocation4], 0
    // Predicated region
    $region2: #{tpu_custom_call.1} parent=1 // pred_check
      _
    $region3: #{tpu_custom_call.1} parent=1 // pred_check_branch
      %21 = sbr.rel (0) target = $region5
    $region4: #{tpu_custom_call.1} parent=1 // pred_region
      _
    $region5: #{tpu_custom_call.1} parent=1 // pred_fallthru
      _
    // Predicated region
    $region6: #{tpu_custom_call.1} parent=1 // pred_check
      _
    $region7: #{tpu_custom_call.1} parent=1 // pred_check_branch
      %23 = sbr.rel (0) target = $region9
    $region8: #{tpu_custom_call.1} parent=1 // pred_region
      _
    $region9: #{tpu_custom_call.1} parent=1 // pred_fallthru
      _
    // Predicated region
    $region10: #{tpu_custom_call.1} parent=1 // pred_check
      _
    $region11: #{tpu_custom_call.1} parent=1 // pred_check_branch
      %25 = sbr.rel (0) target = $region13
    $region12: #{tpu_custom_call.1} parent=1 // pred_region
      %s27 = ssub.s32 256, 256
      %28 = vsyncadd [#allocation3], %s27
      %s29 = sshll.u32 [#allocation2], 4
      %s30 = int_to_ptr.vmem [resolvable:$true] %s29
      %35 = dma.hbm_to_vmem [thread:$0]  %s2, 256, %s30, [#allocation3], 128, 128, 8
    $region13: #{tpu_custom_call.1} parent=1 // pred_fallthru
      _
    // Predicated region
    $region14: #{tpu_custom_call.1} parent=1 // pred_check
      _
    $region15: #{tpu_custom_call.1} parent=1 // pred_check_branch
      %37 = sbr.rel (0) target = $region17
    $region16: #{tpu_custom_call.1} parent=1 // pred_region
      %s39 = ssub.s32 256, 256
      %40 = vsyncadd [#allocation6], %s39
      %s41 = sshll.u32 [#allocation5], 4
      %s42 = int_to_ptr.vmem [resolvable:$true] %s41
      %47 = dma.hbm_to_vmem [thread:$0]  %s3, 256, %s42, [#allocation6], 128, 128, 8
    $region17: #{tpu_custom_call.1} parent=1 // pred_fallthru
      _
    // Predicated region
    $region18: #{tpu_custom_call.1} parent=1 // pred_check
      _
    $region19: #{tpu_custom_call.1} parent=1 // pred_check_branch
      %49 = sbr.rel (0) target = $region21
    $region20: #{tpu_custom_call.1} parent=1 // pred_region
      %s51 = ssub.s32 256, 256
      %52 = vsyncadd [#allocation6], %s51
      %s53 = sshll.u32 [#allocation7], 4
      %s54 = int_to_ptr.vmem [resolvable:$true] %s53
      %59 = dma.hbm_to_vmem [thread:$0]  %s4, 256, %s54, [#allocation6], 128, 128, 8
    $region21: #{tpu_custom_call.1} parent=1 // pred_fallthru
      _
    // Predicated region
    $region22: #{tpu_custom_call.1} parent=1 // pred_check
      _
    $region23: #{tpu_custom_call.1} parent=1 // pred_check_branch
      %61 = sbr.rel (0) target = $region25
    $region24: #{tpu_custom_call.1} parent=1 // pred_region
      %s63 = ssub.s32 32, 32
      %64 = vsyncadd [#allocation9], %s63
      %s66 = sshll.u32 [#allocation8], 4
      %s67 = int_to_ptr.vmem [resolvable:$true] %s66
      %69 = dma.hbm_to_vmem [thread:$0]  %s5, 32, %s67, [#allocation9]
    $region25: #{tpu_custom_call.1} parent=1 // pred_fallthru
      _
    // Predicated region
    $region26: #{tpu_custom_call.1} parent=1 // pred_check
      _
    $region27: #{tpu_custom_call.1} parent=1 // pred_check_branch
      %71 = sbr.rel (0) target = $region29
    $region28: #{tpu_custom_call.1} parent=1 // pred_region
      %s73 = ssub.s32 512, 512
      %74 = vsyncadd [#allocation9], %s73
      %s75 = sshll.u32 [#allocation10], 4
      %s76 = int_to_ptr.vmem [resolvable:$true] %s75
      %81 = dma.hbm_to_vmem [thread:$0]  %s6, 512, %s76, [#allocation9], 128, 128, 8
    $region29: #{tpu_custom_call.1} parent=1 // pred_fallthru
      _
    // Predicated region
    $region30: #{tpu_custom_call.1} parent=1 // pred_check
      _
    $region31: #{tpu_custom_call.1} parent=1 // pred_check_branch
      %83 = sbr.rel (0) target = $region33
    $region32: #{tpu_custom_call.1} parent=1 // pred_region
      %s85 = ssub.s32 512, 512
      %86 = vsyncadd [#allocation12], %s85
      %s87 = sshll.u32 [#allocation11], 4
      %s88 = int_to_ptr.vmem [resolvable:$true] %s87
      %93 = dma.hbm_to_vmem [thread:$0]  %s7, 512, %s88, [#allocation12], 128, 128, 8
    $region33: #{tpu_custom_call.1} parent=1 // pred_fallthru
      _
    // Predicated region
    $region34: #{tpu_custom_call.1} parent=1 // pred_check
      _
    $region35: #{tpu_custom_call.1} parent=1 // pred_check_branch
      %95 = sbr.rel (0) target = $region37
    $region36: #{tpu_custom_call.1} parent=1 // pred_region
      _
    $region37: #{tpu_custom_call.1} parent=1 // pred_fallthru
      _
    // Predicated region
    $region38: #{tpu_custom_call.1} parent=1 // pred_check
      _
    $region39: #{tpu_custom_call.1} parent=1 // pred_check_branch
      %97 = sbr.rel (0) target = $region41
    $region40: #{tpu_custom_call.1} parent=1 // pred_region
      _
    $region41: #{tpu_custom_call.1} parent=1 // pred_fallthru
      _
    // Predicated region
    $region42: #{tpu_custom_call.1} parent=1 // pred_check
      _
    $region43: #{tpu_custom_call.1} parent=1 // pred_check_branch
      %99 = sbr.rel (0) target = $region45
    $region44: #{tpu_custom_call.1} parent=1 // pred_region
      %100 = dma.done [#allocation3], 256
    $region45: #{tpu_custom_call.1} parent=1 // pred_fallthru
      _
    // Predicated region
    $region46: #{tpu_custom_call.1} parent=1 // pred_check
      _
    $region47: #{tpu_custom_call.1} parent=1 // pred_check_branch
      %102 = sbr.rel (0) target = $region49
    $region48: #{tpu_custom_call.1} parent=1 // pred_region
      %103 = dma.done [#allocation6], 256
    $region49: #{tpu_custom_call.1} parent=1 // pred_fallthru
      _
    // Predicated region
    $region50: #{tpu_custom_call.1} parent=1 // pred_check
      _
    $region51: #{tpu_custom_call.1} parent=1 // pred_check_branch
      %105 = sbr.rel (0) target = $region53
    $region52: #{tpu_custom_call.1} parent=1 // pred_region
      %106 = dma.done [#allocation6], 256
    $region53: #{tpu_custom_call.1} parent=1 // pred_fallthru
      _
    // Predicated region
    $region54: #{tpu_custom_call.1} parent=1 // pred_check
      _
    $region55: #{tpu_custom_call.1} parent=1 // pred_check_branch
      %108 = sbr.rel (0) target = $region57
    $region56: #{tpu_custom_call.1} parent=1 // pred_region
      %109 = dma.done [#allocation9], 32
    $region57: #{tpu_custom_call.1} parent=1 // pred_fallthru
      _
    // Predicated region
    $region58: #{tpu_custom_call.1} parent=1 // pred_check
      _
    $region59: #{tpu_custom_call.1} parent=1 // pred_check_branch
      %111 = sbr.rel (0) target = $region61
    $region60: #{tpu_custom_call.1} parent=1 // pred_region
      %112 = dma.done [#allocation9], 512
    $region61: #{tpu_custom_call.1} parent=1 // pred_fallthru
      _
    // Predicated region
    $region62: #{tpu_custom_call.1} parent=1 // pred_check
      _
    $region63: #{tpu_custom_call.1} parent=1 // pred_check_branch
      %114 = sbr.rel (0) target = $region65
    $region64: #{tpu_custom_call.1} parent=1 // pred_region
      %115 = dma.done [#allocation12], 512
    $region65: #{tpu_custom_call.1} parent=1 // pred_fallthru
      _
    %v116 = vld [vmem:[%s0] sm:$0xff]
    %v117 = vld [vmem:[%s1] sm:$0xff]
    %v118 = vlaneseq
    %v119 = vand.u32 %v118, 127
    %120 = vset.pattern.permute.xlu0 0
    %121 = vperm.xlu0 %120, %v117
    %v122 = vpop.permute.xlu0 %121
    %vm123 = vcmp.eq.s32.totalorder %v119, %v122
    %v124 = vsel %vm123, 1, 0
    %v125 = vcvt.s32.f32 %v124
    %v126 = vld [vmem:[#allocation2] sm:$0xff]
    %v127 = vld [vmem:[#allocation2 + $0x8] sm:$0xff]
    %vm128 = vcmask 130048
    %v130 = vsel %vm128, %v125, 0
    %132 = vmatprep.subr.mxu0 0.0
    %133 = vmatpush1.msra.mxu0 0.0
    %134 = vmatprep.subr.mxu0 0.0
    %135 = vmatpush1.msra.mxu0 0.0
    %136 = vmatprep.subr.mxu0 0.0
    %137 = vmatpush1.msra.mxu0 0.0
    %138 = vmatprep.subr.mxu0 0.0
    %139 = vmatpush1.msra.mxu0 0.0
    %140 = vmatprep.subr.mxu0 0.0
    %141 = vmatpush1.msra.mxu0 0.0
    %142 = vmatprep.subr.mxu0 0.0
    %143 = vmatpush1.msra.mxu0 0.0
    %144 = vmatprep.subr.mxu0 0.0
    %145 = vmatpush1.msra.mxu0 0.0
    %146 = vmatprep.subr.mxu0 0.0
    %147 = vmatpush1.msra.mxu0 0.0
    %148 = vmatprep.subr.mxu0 0.0
    %149 = vmatpush1.msra.mxu0 0.0
    %150 = vmatprep.subr.mxu0 0.0
    %151 = vmatpush1.msra.mxu0 0.0
    %152 = vmatprep.subr.mxu0 0.0
    %153 = vmatpush1.msra.mxu0 0.0
    %154 = vmatprep.subr.mxu0 0.0
    %155 = vmatpush1.msra.mxu0 0.0
    %156 = vmatprep.subr.mxu0 0.0
    %157 = vmatpush1.msra.mxu0 0.0
    %158 = vmatprep.subr.mxu0 0.0
    %159 = vmatpush1.msra.mxu0 0.0
    %160 = vmatprep.subr.mxu0 0.0
    %161 = vmatpush1.msra.mxu0 %v127
    %162 = vmatprep.subr.mxu0 0.0
    %163 = vmatpush1.msra.mxu0 %v126
    %164 = vmatprep.subr.mxu0 0.0
    %165 = vmatpush2.msra.mxu0 0.0
    %166 = vmatprep.subr.mxu0 0.0
    %167 = vmatpush2.msra.mxu0 0.0
    %168 = vmatprep.subr.mxu0 0.0
    %169 = vmatpush2.msra.mxu0 0.0
    %170 = vmatprep.subr.mxu0 0.0
    %171 = vmatpush2.msra.mxu0 0.0
    %172 = vmatprep.subr.mxu0 0.0
    %173 = vmatpush2.msra.mxu0 0.0
    %174 = vmatprep.subr.mxu0 0.0
    %175 = vmatpush2.msra.mxu0 0.0
    %176 = vmatprep.subr.mxu0 0.0
    %177 = vmatpush2.msra.mxu0 0.0
    %178 = vmatprep.subr.mxu0 0.0
    %179 = vmatpush2.msra.mxu0 0.0
    %180 = vmatprep.subr.mxu0 0.0
    %181 = vmatpush2.msra.mxu0 0.0
    %182 = vmatprep.subr.mxu0 0.0
    %183 = vmatpush2.msra.mxu0 0.0
    %184 = vmatprep.subr.mxu0 0.0
    %185 = vmatpush2.msra.mxu0 0.0
    %186 = vmatprep.subr.mxu0 0.0
    %187 = vmatpush2.msra.mxu0 0.0
    %188 = vmatprep.subr.mxu0 0.0
    %189 = vmatpush2.msra.mxu0 0.0
    %190 = vmatprep.subr.mxu0 0.0
    %191 = vmatpush2.msra.mxu0 0.0
    %192 = vmatprep.subr.mxu0 0.0
    %193 = vmatpush2.msra.mxu0 0.0
    %194 = vmatprep.subr.mxu0 0.0
    %195 = vmatpush2.msra.mxu0 0.0
    %196 = vmatprep.mubr.f32.mxu0 0.0
    %197 = vmatmul.mubr.f32.gmra.mxu0 %v130
    %v198 = vpop.f32.mrf.mxu0
    %v199 = vadd.f32 0.0, %v198
    %v200 = vpop.f32.mrf.mxu0
    %201 = vdwg.mxu0
    %v202 = vld [vmem:[#allocation5] sm:$0xff]
    %v203 = vld [vmem:[#allocation5 + $0x8] sm:$0xff]
    %204 = vmatprep.subr.mxu0 0.0
    %205 = vmatpush1.msra.mxu0 0.0
    %206 = vmatprep.subr.mxu0 0.0
    %207 = vmatpush1.msra.mxu0 0.0
    %208 = vmatprep.subr.mxu0 0.0
    %209 = vmatpush1.msra.mxu0 0.0
    %210 = vmatprep.subr.mxu0 0.0
    %211 = vmatpush1.msra.mxu0 0.0
    %212 = vmatprep.subr.mxu0 0.0
    %213 = vmatpush1.msra.mxu0 0.0
    %214 = vmatprep.subr.mxu0 0.0
    %215 = vmatpush1.msra.mxu0 0.0
    %216 = vmatprep.subr.mxu0 0.0
    %217 = vmatpush1.msra.mxu0 0.0
    %218 = vmatprep.subr.mxu0 0.0
    %219 = vmatpush1.msra.mxu0 0.0
    %220 = vmatprep.subr.mxu0 0.0
    %221 = vmatpush1.msra.mxu0 0.0
    %222 = vmatprep.subr.mxu0 0.0
    %223 = vmatpush1.msra.mxu0 0.0
    %224 = vmatprep.subr.mxu0 0.0
    %225 = vmatpush1.msra.mxu0 0.0
    %226 = vmatprep.subr.mxu0 0.0
    %227 = vmatpush1.msra.mxu0 0.0
    %228 = vmatprep.subr.mxu0 0.0
    %229 = vmatpush1.msra.mxu0 0.0
    %230 = vmatprep.subr.mxu0 0.0
    %231 = vmatpush1.msra.mxu0 0.0
    %232 = vmatprep.subr.mxu0 0.0
    %233 = vmatpush1.msra.mxu0 %v203
    %234 = vmatprep.subr.mxu0 0.0
    %235 = vmatpush1.msra.mxu0 %v202
    %236 = vmatprep.subr.mxu0 0.0
    %237 = vmatpush2.msra.mxu0 0.0
    %238 = vmatprep.subr.mxu0 0.0
    %239 = vmatpush2.msra.mxu0 0.0
    %240 = vmatprep.subr.mxu0 0.0
    %241 = vmatpush2.msra.mxu0 0.0
    %242 = vmatprep.subr.mxu0 0.0
    %243 = vmatpush2.msra.mxu0 0.0
    %244 = vmatprep.subr.mxu0 0.0
    %245 = vmatpush2.msra.mxu0 0.0
    %246 = vmatprep.subr.mxu0 0.0
    %247 = vmatpush2.msra.mxu0 0.0
    %248 = vmatprep.subr.mxu0 0.0
    %249 = vmatpush2.msra.mxu0 0.0
    %250 = vmatprep.subr.mxu0 0.0
    %251 = vmatpush2.msra.mxu0 0.0
    %252 = vmatprep.subr.mxu0 0.0
    %253 = vmatpush2.msra.mxu0 0.0
    %254 = vmatprep.subr.mxu0 0.0
    %255 = vmatpush2.msra.mxu0 0.0
    %256 = vmatprep.subr.mxu0 0.0
    %257 = vmatpush2.msra.mxu0 0.0
    %258 = vmatprep.subr.mxu0 0.0
    %259 = vmatpush2.msra.mxu0 0.0
    %260 = vmatprep.subr.mxu0 0.0
    %261 = vmatpush2.msra.mxu0 0.0
    %262 = vmatprep.subr.mxu0 0.0
    %263 = vmatpush2.msra.mxu0 0.0
    %264 = vmatprep.subr.mxu0 0.0
    %265 = vmatpush2.msra.mxu0 0.0
    %266 = vmatprep.subr.mxu0 0.0
    %267 = vmatpush2.msra.mxu0 0.0
    %268 = vmatprep.mubr.f32.mxu0 0.0
    %269 = vmatmul.mubr.f32.gmra.mxu0 %v130
    %v270 = vpop.f32.mrf.mxu0
    %v271 = vadd.f32 0.0, %v270
    %v272 = vpop.f32.mrf.mxu0
    %273 = vdwg.mxu0
    %v274 = vld [vmem:[#allocation7] sm:$0xff]
    %v275 = vld [vmem:[#allocation7 + $0x8] sm:$0xff]
    %276 = vmatprep.subr.mxu0 0.0
    %277 = vmatpush1.msra.mxu0 0.0
    %278 = vmatprep.subr.mxu0 0.0
    %279 = vmatpush1.msra.mxu0 0.0
    %280 = vmatprep.subr.mxu0 0.0
    %281 = vmatpush1.msra.mxu0 0.0
    %282 = vmatprep.subr.mxu0 0.0
    %283 = vmatpush1.msra.mxu0 0.0
    %284 = vmatprep.subr.mxu0 0.0
    %285 = vmatpush1.msra.mxu0 0.0
    %286 = vmatprep.subr.mxu0 0.0
    %287 = vmatpush1.msra.mxu0 0.0
    %288 = vmatprep.subr.mxu0 0.0
    %289 = vmatpush1.msra.mxu0 0.0
    %290 = vmatprep.subr.mxu0 0.0
    %291 = vmatpush1.msra.mxu0 0.0
    %292 = vmatprep.subr.mxu0 0.0
    %293 = vmatpush1.msra.mxu0 0.0
    %294 = vmatprep.subr.mxu0 0.0
    %295 = vmatpush1.msra.mxu0 0.0
    %296 = vmatprep.subr.mxu0 0.0
    %297 = vmatpush1.msra.mxu0 0.0
    %298 = vmatprep.subr.mxu0 0.0
    %299 = vmatpush1.msra.mxu0 0.0
    %300 = vmatprep.subr.mxu0 0.0
    %301 = vmatpush1.msra.mxu0 0.0
    %302 = vmatprep.subr.mxu0 0.0
    %303 = vmatpush1.msra.mxu0 0.0
    %304 = vmatprep.subr.mxu0 0.0
    %305 = vmatpush1.msra.mxu0 %v275
    %306 = vmatprep.subr.mxu0 0.0
    %307 = vmatpush1.msra.mxu0 %v274
    %308 = vmatprep.subr.mxu0 0.0
    %309 = vmatpush2.msra.mxu0 0.0
    %310 = vmatprep.subr.mxu0 0.0
    %311 = vmatpush2.msra.mxu0 0.0
    %312 = vmatprep.subr.mxu0 0.0
    %313 = vmatpush2.msra.mxu0 0.0
    %314 = vmatprep.subr.mxu0 0.0
    %315 = vmatpush2.msra.mxu0 0.0
    %316 = vmatprep.subr.mxu0 0.0
    %317 = vmatpush2.msra.mxu0 0.0
    %318 = vmatprep.subr.mxu0 0.0
    %319 = vmatpush2.msra.mxu0 0.0
    %320 = vmatprep.subr.mxu0 0.0
    %321 = vmatpush2.msra.mxu0 0.0
    %322 = vmatprep.subr.mxu0 0.0
    %323 = vmatpush2.msra.mxu0 0.0
    %324 = vmatprep.subr.mxu0 0.0
    %325 = vmatpush2.msra.mxu0 0.0
    %326 = vmatprep.subr.mxu0 0.0
    %327 = vmatpush2.msra.mxu0 0.0
    %328 = vmatprep.subr.mxu0 0.0
    %329 = vmatpush2.msra.mxu0 0.0
    %330 = vmatprep.subr.mxu0 0.0
    %331 = vmatpush2.msra.mxu0 0.0
    %332 = vmatprep.subr.mxu0 0.0
    %333 = vmatpush2.msra.mxu0 0.0
    %334 = vmatprep.subr.mxu0 0.0
    %335 = vmatpush2.msra.mxu0 0.0
    %336 = vmatprep.subr.mxu0 0.0
    %337 = vmatpush2.msra.mxu0 0.0
    %338 = vmatprep.subr.mxu0 0.0
    %339 = vmatpush2.msra.mxu0 0.0
    %340 = vmatprep.mubr.f32.mxu0 0.0
    %341 = vmatmul.mubr.f32.gmra.mxu0 %v130
    %v342 = vpop.f32.mrf.mxu0
    %v343 = vadd.f32 0.0, %v342
    %v344 = vpop.f32.mrf.mxu0
    %345 = vdwg.mxu0
    %v346 = vld [vmem:[#allocation8] sm:$0x3]
    %348 = vset.pattern.permute.xlu0 0
    %349 = vperm.xlu0 %348, %v116
    %v350 = vpop.permute.xlu0 %349
    %v352 = vlaneseq
    %v353 = vshrl.u32 %v352, 7
    %v354 = vsub.s32 0, %v353
    %v355 = vrot.slane %v346, %v354
    %v356 = vmul.f32 %v350, %v355
    %357 = vset.pattern.permute.xlu0 1
    %358 = vperm.xlu0 %357, %v116
    %v359 = vpop.permute.xlu0 %358
    %v361 = vlaneseq
    %v362 = vshrl.u32 %v361, 7
    %v363 = vsub.s32 1, %v362
    %v364 = vrot.slane %v346, %v363
    %v365 = vmul.f32 %v359, %v364
    %v366 = vadd.f32 %v356, %v365
    %v367 = vadd.f32 %v366, %v199
    %v368 = vmax.f32 %v367, 0.0
    %v369 = vld [vmem:[#allocation10] sm:$0xff]
    %v370 = vld [vmem:[#allocation10 + $0x8] sm:$0xff]
    %v371 = vld [vmem:[#allocation10 + $0x10] sm:$0xff]
    %v372 = vld [vmem:[#allocation10 + $0x18] sm:$0xff]
    %vm373 = vcmask 261120
    %v375 = vsel %vm373, %v368, 0
    %377 = vmatprep.subr.mxu0 0.0
    %378 = vmatpush1.msra.mxu0 0.0
    %379 = vmatprep.subr.mxu0 0.0
    %380 = vmatpush1.msra.mxu0 0.0
    %381 = vmatprep.subr.mxu0 0.0
    %382 = vmatpush1.msra.mxu0 0.0
    %383 = vmatprep.subr.mxu0 0.0
    %384 = vmatpush1.msra.mxu0 0.0
    %385 = vmatprep.subr.mxu0 0.0
    %386 = vmatpush1.msra.mxu0 0.0
    %387 = vmatprep.subr.mxu0 0.0
    %388 = vmatpush1.msra.mxu0 0.0
    %389 = vmatprep.subr.mxu0 0.0
    %390 = vmatpush1.msra.mxu0 0.0
    %391 = vmatprep.subr.mxu0 0.0
    %392 = vmatpush1.msra.mxu0 0.0
    %393 = vmatprep.subr.mxu0 0.0
    %394 = vmatpush1.msra.mxu0 0.0
    %395 = vmatprep.subr.mxu0 0.0
    %396 = vmatpush1.msra.mxu0 0.0
    %397 = vmatprep.subr.mxu0 0.0
    %398 = vmatpush1.msra.mxu0 0.0
    %399 = vmatprep.subr.mxu0 0.0
    %400 = vmatpush1.msra.mxu0 0.0
    %401 = vmatprep.subr.mxu0 0.0
    %402 = vmatpush1.msra.mxu0 %v372
    %403 = vmatprep.subr.mxu0 0.0
    %404 = vmatpush1.msra.mxu0 %v371
    %405 = vmatprep.subr.mxu0 0.0
    %406 = vmatpush1.msra.mxu0 %v370
    %407 = vmatprep.subr.mxu0 0.0
    %408 = vmatpush1.msra.mxu0 %v369
    %409 = vmatprep.subr.mxu0 0.0
    %410 = vmatpush2.msra.mxu0 0.0
    %411 = vmatprep.subr.mxu0 0.0
    %412 = vmatpush2.msra.mxu0 0.0
    %413 = vmatprep.subr.mxu0 0.0
    %414 = vmatpush2.msra.mxu0 0.0
    %415 = vmatprep.subr.mxu0 0.0
    %416 = vmatpush2.msra.mxu0 0.0
    %417 = vmatprep.subr.mxu0 0.0
    %418 = vmatpush2.msra.mxu0 0.0
    %419 = vmatprep.subr.mxu0 0.0
    %420 = vmatpush2.msra.mxu0 0.0
    %421 = vmatprep.subr.mxu0 0.0
    %422 = vmatpush2.msra.mxu0 0.0
    %423 = vmatprep.subr.mxu0 0.0
    %424 = vmatpush2.msra.mxu0 0.0
    %425 = vmatprep.subr.mxu0 0.0
    %426 = vmatpush2.msra.mxu0 0.0
    %427 = vmatprep.subr.mxu0 0.0
    %428 = vmatpush2.msra.mxu0 0.0
    %429 = vmatprep.subr.mxu0 0.0
    %430 = vmatpush2.msra.mxu0 0.0
    %431 = vmatprep.subr.mxu0 0.0
    %432 = vmatpush2.msra.mxu0 0.0
    %433 = vmatprep.subr.mxu0 0.0
    %434 = vmatpush2.msra.mxu0 0.0
    %435 = vmatprep.subr.mxu0 0.0
    %436 = vmatpush2.msra.mxu0 0.0
    %437 = vmatprep.subr.mxu0 0.0
    %438 = vmatpush2.msra.mxu0 0.0
    %439 = vmatprep.subr.mxu0 0.0
    %440 = vmatpush2.msra.mxu0 0.0
    %441 = vmatprep.mubr.f32.mxu0 0.0
    %442 = vmatmul.mubr.f32.gmra.mxu0 %v375
    %v443 = vpop.f32.mrf.mxu0
    %v444 = vadd.f32 %v271, %v443
    %v445 = vpop.f32.mrf.mxu0
    %446 = vdwg.mxu0
    %v447 = vmax.f32 %v444, 0.0
    %v448 = vld [vmem:[#allocation11] sm:$0xff]
    %v449 = vld [vmem:[#allocation11 + $0x8] sm:$0xff]
    %v450 = vld [vmem:[#allocation11 + $0x10] sm:$0xff]
    %v451 = vld [vmem:[#allocation11 + $0x18] sm:$0xff]
    %v453 = vsel %vm373, %v447, 0
    %455 = vmatprep.subr.mxu0 0.0
    %456 = vmatpush1.msra.mxu0 0.0
    %457 = vmatprep.subr.mxu0 0.0
    %458 = vmatpush1.msra.mxu0 0.0
    %459 = vmatprep.subr.mxu0 0.0
    %460 = vmatpush1.msra.mxu0 0.0
    %461 = vmatprep.subr.mxu0 0.0
    %462 = vmatpush1.msra.mxu0 0.0
    %463 = vmatprep.subr.mxu0 0.0
    %464 = vmatpush1.msra.mxu0 0.0
    %465 = vmatprep.subr.mxu0 0.0
    %466 = vmatpush1.msra.mxu0 0.0
    %467 = vmatprep.subr.mxu0 0.0
    %468 = vmatpush1.msra.mxu0 0.0
    %469 = vmatprep.subr.mxu0 0.0
    %470 = vmatpush1.msra.mxu0 0.0
    %471 = vmatprep.subr.mxu0 0.0
    %472 = vmatpush1.msra.mxu0 0.0
    %473 = vmatprep.subr.mxu0 0.0
    %474 = vmatpush1.msra.mxu0 0.0
    %475 = vmatprep.subr.mxu0 0.0
    %476 = vmatpush1.msra.mxu0 0.0
    %477 = vmatprep.subr.mxu0 0.0
    %478 = vmatpush1.msra.mxu0 0.0
    %479 = vmatprep.subr.mxu0 0.0
    %480 = vmatpush1.msra.mxu0 %v451
    %481 = vmatprep.subr.mxu0 0.0
    %482 = vmatpush1.msra.mxu0 %v450
    %483 = vmatprep.subr.mxu0 0.0
    %484 = vmatpush1.msra.mxu0 %v449
    %485 = vmatprep.subr.mxu0 0.0
    %486 = vmatpush1.msra.mxu0 %v448
    %487 = vmatprep.subr.mxu0 0.0
    %488 = vmatpush2.msra.mxu0 0.0
    %489 = vmatprep.subr.mxu0 0.0
    %490 = vmatpush2.msra.mxu0 0.0
    %491 = vmatprep.subr.mxu0 0.0
    %492 = vmatpush2.msra.mxu0 0.0
    %493 = vmatprep.subr.mxu0 0.0
    %494 = vmatpush2.msra.mxu0 0.0
    %495 = vmatprep.subr.mxu0 0.0
    %496 = vmatpush2.msra.mxu0 0.0
    %497 = vmatprep.subr.mxu0 0.0
    %498 = vmatpush2.msra.mxu0 0.0
    %499 = vmatprep.subr.mxu0 0.0
    %500 = vmatpush2.msra.mxu0 0.0
    %501 = vmatprep.subr.mxu0 0.0
    %502 = vmatpush2.msra.mxu0 0.0
    %503 = vmatprep.subr.mxu0 0.0
    %504 = vmatpush2.msra.mxu0 0.0
    %505 = vmatprep.subr.mxu0 0.0
    %506 = vmatpush2.msra.mxu0 0.0
    %507 = vmatprep.subr.mxu0 0.0
    %508 = vmatpush2.msra.mxu0 0.0
    %509 = vmatprep.subr.mxu0 0.0
    %510 = vmatpush2.msra.mxu0 0.0
    %511 = vmatprep.subr.mxu0 0.0
    %512 = vmatpush2.msra.mxu0 0.0
    %513 = vmatprep.subr.mxu0 0.0
    %514 = vmatpush2.msra.mxu0 0.0
    %515 = vmatprep.subr.mxu0 0.0
    %516 = vmatpush2.msra.mxu0 0.0
    %517 = vmatprep.subr.mxu0 0.0
    %518 = vmatpush2.msra.mxu0 0.0
    %519 = vmatprep.mubr.f32.mxu0 0.0
    %520 = vmatmul.mubr.f32.gmra.mxu0 %v453
    %v521 = vpop.f32.mrf.mxu0
    %v522 = vadd.f32 %v343, %v521
    %v523 = vpop.f32.mrf.mxu0
    %524 = vdwg.mxu0
    %v525 = vmax.f32 %v522, 0.0
    %v526 = vld [vmem:[%s8] sm:$0xff]
    %v527 = vld [vmem:[%s8 + $0x8] sm:$0xff]
    %v528 = vld [vmem:[%s8 + $0x10] sm:$0xff]
    %v529 = vld [vmem:[%s8 + $0x18] sm:$0xff]
    %v530 = vld [vmem:[%s9] sm:$0x1]
    %v532 = vlaneseq
    %v533 = vshrl.u32 %v532, 7
    %v534 = vsub.s32 0, %v533
    %v535 = vrot.slane %v530, %v534
    %v538 = vsel %vm373, %v525, 0
    %540 = vmatprep.subr.mxu0 0.0
    %541 = vmatpush1.msra.mxu0 0.0
    %542 = vmatprep.subr.mxu0 0.0
    %543 = vmatpush1.msra.mxu0 0.0
    %544 = vmatprep.subr.mxu0 0.0
    %545 = vmatpush1.msra.mxu0 0.0
    %546 = vmatprep.subr.mxu0 0.0
    %547 = vmatpush1.msra.mxu0 0.0
    %548 = vmatprep.subr.mxu0 0.0
    %549 = vmatpush1.msra.mxu0 0.0
    %550 = vmatprep.subr.mxu0 0.0
    %551 = vmatpush1.msra.mxu0 0.0
    %552 = vmatprep.subr.mxu0 0.0
    %553 = vmatpush1.msra.mxu0 0.0
    %554 = vmatprep.subr.mxu0 0.0
    %555 = vmatpush1.msra.mxu0 0.0
    %556 = vmatprep.subr.mxu0 0.0
    %557 = vmatpush1.msra.mxu0 0.0
    %558 = vmatprep.subr.mxu0 0.0
    %559 = vmatpush1.msra.mxu0 0.0
    %560 = vmatprep.subr.mxu0 0.0
    %561 = vmatpush1.msra.mxu0 0.0
    %562 = vmatprep.subr.mxu0 0.0
    %563 = vmatpush1.msra.mxu0 0.0
    %564 = vmatprep.subr.mxu0 0.0
    %565 = vmatpush1.msra.mxu0 %v529
    %566 = vmatprep.subr.mxu0 0.0
    %567 = vmatpush1.msra.mxu0 %v528
    %568 = vmatprep.subr.mxu0 0.0
    %569 = vmatpush1.msra.mxu0 %v527
    %570 = vmatprep.subr.mxu0 0.0
    %571 = vmatpush1.msra.mxu0 %v526
    %572 = vmatprep.subr.mxu0 0.0
    %573 = vmatpush2.msra.mxu0 0.0
    %574 = vmatprep.subr.mxu0 0.0
    %575 = vmatpush2.msra.mxu0 0.0
    %576 = vmatprep.subr.mxu0 0.0
    %577 = vmatpush2.msra.mxu0 0.0
    %578 = vmatprep.subr.mxu0 0.0
    %579 = vmatpush2.msra.mxu0 0.0
    %580 = vmatprep.subr.mxu0 0.0
    %581 = vmatpush2.msra.mxu0 0.0
    %582 = vmatprep.subr.mxu0 0.0
    %583 = vmatpush2.msra.mxu0 0.0
    %584 = vmatprep.subr.mxu0 0.0
    %585 = vmatpush2.msra.mxu0 0.0
    %586 = vmatprep.subr.mxu0 0.0
    %587 = vmatpush2.msra.mxu0 0.0
    %588 = vmatprep.subr.mxu0 0.0
    %589 = vmatpush2.msra.mxu0 0.0
    %590 = vmatprep.subr.mxu0 0.0
    %591 = vmatpush2.msra.mxu0 0.0
    %592 = vmatprep.subr.mxu0 0.0
    %593 = vmatpush2.msra.mxu0 0.0
    %594 = vmatprep.subr.mxu0 0.0
    %595 = vmatpush2.msra.mxu0 0.0
    %596 = vmatprep.subr.mxu0 0.0
    %597 = vmatpush2.msra.mxu0 0.0
    %598 = vmatprep.subr.mxu0 0.0
    %599 = vmatpush2.msra.mxu0 0.0
    %600 = vmatprep.subr.mxu0 0.0
    %601 = vmatpush2.msra.mxu0 0.0
    %602 = vmatprep.subr.mxu0 0.0
    %603 = vmatpush2.msra.mxu0 0.0
    %604 = vmatprep.mubr.f32.mxu0 0.0
    %605 = vmatmul.mubr.f32.gmra.mxu0 %v538
    %v606 = vpop.f32.mrf.mxu0
    %v607 = vadd.f32 %v535, %v606
    %v608 = vpop.f32.mrf.mxu0
    %609 = vdwg.mxu0
    %610 = vst [vmem:[#allocation13] sm:$0xff] %v607
    // Predicated region
    $region66: #{tpu_custom_call.1} parent=1 // pred_check
      _
    $region67: #{tpu_custom_call.1} parent=1 // pred_check_branch
      %612 = sbr.rel (0) target = $region69
    $region68: #{tpu_custom_call.1} parent=1 // pred_region
      %s614 = ssub.s32 128, 128
      %615 = vsyncadd [#allocation4], %s614
      %s617 = sshll.u32 [#allocation13], 4
      %s618 = int_to_ptr.vmem [resolvable:$true] %s617
      %620 = dma.vmem_to_hbm [thread:$0]  %s618, 128, %s10, [#allocation4]
    $region69: #{tpu_custom_call.1} parent=1 // pred_fallthru
      _
    // Predicated region
    $region70: #{tpu_custom_call.1} parent=1 // pred_check
      _
    $region71: #{tpu_custom_call.1} parent=1 // pred_check_branch
      %622 = sbr.rel (0) target = $region73
    $region72: #{tpu_custom_call.1} parent=1 // pred_region
      %623 = dma.done [#allocation4], 128
    $region73: #{tpu_custom_call.1} parent=1 // pred_fallthru
      _
    %624 = vsyncpa [#allocation3], 1
    %625 = vsyncpa [#allocation6], 1
    %626 = vsyncpa [#allocation9], 1
    %627 = vsyncpa [#allocation12], 1
    %628 = vsyncpa [#allocation4], 1

</llo_original>
